<compile_context>
chip_gen: v7x
topology: tpu7x:2x2x1
jax: 0.10.0
libtpu: 0.0.40
codegen_flags: <defaults>
</compile_context>

<pallas_src>
import functools

import jax
import jax.numpy as jnp
from jax import lax
from jax.experimental import pallas as pl
from jax.experimental.pallas import tpu as pltpu


def _round_up(v, m):
    return ((v + m - 1) // m) * m


def _dag_encoder_kernel(x_ref, h_ref, starts_ref, ends_ref, wx_ref, wh_ref, b_ref,
                        o_ref, accx_ref, acch_ref, iota_ref, *, tile_m, n_rows):
    i = pl.program_id(0)
    last = pl.num_programs(0) - 1
    s_pad = accx_ref.shape[0]

    @pl.when(i == 0)
    def _init():
        accx_ref[...] = jnp.zeros_like(accx_ref)
        acch_ref[...] = jnp.zeros_like(acch_ref)
        # Hoisted column iota: built once, reused on every grid step.
        iota_ref[...] = lax.broadcasted_iota(jnp.int32, (s_pad, tile_m), 1)

    shift = i * tile_m
    lo = starts_ref[...] - shift                     # (s_pad, 1) int32
    hi = ends_ref[...] - shift                       # (s_pad, 1) int32

    def _accumulate(x, h):
        local = iota_ref[...]                        # (s_pad, tile_m)
        seg_mask = (local >= lo) & (local < hi)      # CSR segment membership
        mx = seg_mask.astype(x.dtype)
        accx_ref[...] += jnp.dot(mx, x, preferred_element_type=jnp.float32)
        mh = mx if h.dtype == x.dtype else seg_mask.astype(h.dtype)
        acch_ref[...] += jnp.dot(mh, h, preferred_element_type=jnp.float32)

    @pl.when(i < last)
    def _full_tile():
        _accumulate(x_ref[...], h_ref[...])

    @pl.when(i == last)
    def _last_tile():
        # Only the final tile can be partial; zero its padded rows so NaN/Inf
        # padding cannot poison the mask matmul (0 * NaN == NaN on the MXU).
        valid = (shift + lax.broadcasted_iota(jnp.int32, (tile_m, 1), 0)) < n_rows
        x = x_ref[...]
        h = h_ref[...]
        _accumulate(jnp.where(valid, x, jnp.zeros_like(x)),
                    jnp.where(valid, h, jnp.zeros_like(h)))

        # Epilogue: two tiny contractions against the torch-layout weight halves
        # plus a segment-length-scaled bias.
        seg_len = (ends_ref[...] - starts_ref[...]).astype(jnp.float32)   # (s_pad, 1)
        y = lax.dot_general(accx_ref[...], wx_ref[...],
                            dimension_numbers=(((1,), (1,)), ((), ())),
                            preferred_element_type=jnp.float32)
        y = y + lax.dot_general(acch_ref[...], wh_ref[...],
                                dimension_numbers=(((1,), (1,)), ((), ())),
                                preferred_element_type=jnp.float32)
        y = y + seg_len * b_ref[...]
        o_ref[...] = y.astype(o_ref.dtype)


def _vmem_estimate(tile_m, f, e, e_out, s_pad, itemsize=4):
    """Rough VMEM footprint (with (8,128) tile padding and double-buffering)."""
    def pad2d(rows, cols):
        return _round_up(max(rows, 1), 8) * _round_up(max(cols, 1), 128) * itemsize
    return (2 * pad2d(tile_m, f) + 2 * pad2d(tile_m, e)        # double-buffered x / h tiles
            + pad2d(s_pad, f) + pad2d(s_pad, e)                # accumulators
            + pad2d(s_pad, tile_m)                             # hoisted iota scratch
            + 2 * (pad2d(e_out, f) + pad2d(e_out, e))          # resident weight halves
            + 4 * pad2d(s_pad, 1) + 2 * pad2d(1, e_out)        # starts / ends / bias
            + 2 * pad2d(s_pad, e_out))                         # output block


def dag_encoder_forward(x_feat, h_node, weight, bias, ptr, *, tile_m=1024):
    """x_feat: (N, F). h_node: (N, E). weight: (E_out, F+E) torch layout. bias: (E_out,). ptr: (S+1,)."""
    n, f = x_feat.shape
    e = h_node.shape[1]
    e_out = weight.shape[0]
    assert weight.shape[1] == f + e

    # Split the torch-layout weight so x_feat / h_node can be streamed without
    # ever materializing the (N, F+E) concatenation in HBM.
    w_x = weight[:, :f]
    w_h = weight[:, f:]
    b2d = bias.reshape(1, e_out)

    ptr = jnp.asarray(ptr, dtype=jnp.int32)
    num_segs = int(ptr.shape[0]) - 1
    s_pad = max(8, _round_up(num_segs, 8))

    # Per-segment [start, end) row ranges; padded segments are empty ([n, n)).
    starts = jnp.full((s_pad, 1), n, dtype=jnp.int32).at[:num_segs, 0].set(ptr[:-1])
    ends = jnp.full((s_pad, 1), n, dtype=jnp.int32).at[:num_segs, 0].set(ptr[1:])

    # Row tile: large by default (this is an HBM-streaming reduction), multiple
    # of 8, clamped to the data and to a VMEM budget safe on v7x (64 MiB phys).
    tile_m = _round_up(max(8, min(tile_m, _round_up(n, 8))), 8)
    vmem_budget = 40 * (1 << 20)
    while tile_m > 256 and _vmem_estimate(tile_m, f, e, e_out, s_pad) > vmem_budget:
        tile_m //= 2
    grid_m = pl.cdiv(n, tile_m)
    vmem_limit = int(min(max(2 * _vmem_estimate(tile_m, f, e, e_out, s_pad),
                             32 * (1 << 20)), 48 * (1 << 20)))

    # TODO(synk): constant-index inputs (starts/ends/W/bias) could use
    # pipeline_mode=pl.Buffered(1) to drop their second pipeline buffer; on v7x
    # a leading size-2 "parallel" row split (one accumulator/output slab per
    # TensorCore, summed outside) would use both cores; for num_dags >> 8,
    # scalar-prefetch a per-tile segment window instead of the full mask.
    kernel = functools.partial(_dag_encoder_kernel, tile_m=tile_m, n_rows=n)
    out = pl.pallas_call(
        kernel,
        out_shape=jax.ShapeDtypeStruct((s_pad, e_out), h_node.dtype),
        grid_spec=pltpu.PrefetchScalarGridSpec(
            num_scalar_prefetch=0,
            grid=(grid_m,),
            in_specs=[
                pl.BlockSpec((tile_m, f), lambda i: (i, 0)),   # streamed x_feat tiles
                pl.BlockSpec((tile_m, e), lambda i: (i, 0)),   # streamed h_node tiles
                pl.BlockSpec((s_pad, 1), lambda i: (0, 0)),    # seg starts (resident)
                pl.BlockSpec((s_pad, 1), lambda i: (0, 0)),    # seg ends (resident)
                pl.BlockSpec((e_out, f), lambda i: (0, 0)),    # W[:, :F] (resident)
                pl.BlockSpec((e_out, e), lambda i: (0, 0)),    # W[:, F:] (resident)
                pl.BlockSpec((1, e_out), lambda i: (0, 0)),    # bias (resident)
            ],
            out_specs=pl.BlockSpec((s_pad, e_out), lambda i: (0, 0)),
            scratch_shapes=[
                pltpu.VMEM((s_pad, f), jnp.float32),           # per-segment x_feat sums
                pltpu.VMEM((s_pad, e), jnp.float32),           # per-segment h_node sums
                pltpu.VMEM((s_pad, tile_m), jnp.int32),        # hoisted column iota
            ],
        ),
        compiler_params=pltpu.CompilerParams(
            # Single grid axis is a sequential reduction over row tiles.
            dimension_semantics=("arbitrary",),
            vmem_limit_bytes=vmem_limit,
        ),
    )(x_feat, h_node, starts, ends, w_x, w_h, b2d)
    return out[:num_segs]


if __name__ == "__main__":
    num_node_features = 5
    embed_dim = 16
    n_nodes = 13                       # not a multiple of the row tile: exercises tail masking

    key = jax.random.PRNGKey(0)
    k_x, k_h, k_w, k_b = jax.random.split(key, 4)

    d_in = num_node_features + embed_dim
    lim = 1.0 / (d_in ** 0.5)          # nn.Linear default init range
    weight = jax.random.uniform(k_w, (embed_dim, d_in), jnp.float32, -lim, lim)
    bias = jax.random.uniform(k_b, (embed_dim,), jnp.float32, -lim, lim)

    x_feat = jax.random.normal(k_x, (n_nodes, num_node_features), jnp.float32)
    h_node = jax.random.normal(k_h, (n_nodes, embed_dim), jnp.float32)
    ptr = jnp.array([0, 5, 5, 13], dtype=jnp.int32)   # 3 DAGs, middle one empty

    # Reference (plain JAX, mirrors the torch module: cat -> linear -> segment_csr sum).
    h_in = jnp.concatenate([x_feat, h_node], axis=1)
    lin = h_in @ weight.T + bias
    ptr_h = [int(v) for v in ptr]
    ref = jnp.stack([jnp.sum(lin[ptr_h[i]:ptr_h[i + 1]], axis=0)
                     for i in range(len(ptr_h) - 1)])

    # 1) Default tile: whole array in one grid step (tests epilogue + tail mask).
    out = jax.block_until_ready(dag_encoder_forward(x_feat, h_node, weight, bias, ptr))
    assert out.shape == (len(ptr_h) - 1, embed_dim) and out.dtype == jnp.float32
    assert jnp.allclose(out, ref, atol=1e-4, rtol=1e-4), (out, ref)

    # 2) Tiny tile: multi-step grid, exercises cross-tile segment accumulation.
    out2 = jax.block_until_ready(
        dag_encoder_forward(x_feat, h_node, weight, bias, ptr, tile_m=8))
    assert jnp.allclose(out2, ref, atol=1e-4, rtol=1e-4), (out2, ref)

    print("KERNEL_OK")
</pallas_src>

<mosaic_0001>
module attributes {stable_mosaic.version = 11 : i64} {
  func.func @_dag_encoder_kernel(%arg0: i32, %arg1: memref<16x5xf32, #tpu.memory_space<vmem>>, %arg2: memref<16x16xf32, #tpu.memory_space<vmem>>, %arg3: memref<8x1xi32, #tpu.memory_space<vmem>>, %arg4: memref<8x1xi32, #tpu.memory_space<vmem>>, %arg5: memref<16x5xf32, #tpu.memory_space<vmem>>, %arg6: memref<16x16xf32, #tpu.memory_space<vmem>>, %arg7: memref<1x16xf32, #tpu.memory_space<vmem>>, %arg8: memref<8x16xf32, #tpu.memory_space<vmem>>, %arg9: memref<8x5xf32, #tpu.memory_space<vmem>>, %arg10: memref<8x16xf32, #tpu.memory_space<vmem>>, %arg11: memref<8x16xi32, #tpu.memory_space<vmem>>) attributes {dimension_semantics = [#tpu.dimension_semantics<arbitrary>], iteration_bounds = array<i64: 1>, scalar_prefetch = 0 : i64, scratch_operands = 3 : i64, tpu.core_type = #tpu.core_type<tc>, window_params = [{transform_indices = @transform_0, window_bounds = array<i64: 16, 5>}, {transform_indices = @transform_1, window_bounds = array<i64: 16, 16>}, {pipeline_mode = #tpu.pipeline_mode<synchronous>, transform_indices = @transform_2, window_bounds = array<i64: 8, 1>}, {pipeline_mode = #tpu.pipeline_mode<synchronous>, transform_indices = @transform_3, window_bounds = array<i64: 8, 1>}, {pipeline_mode = #tpu.pipeline_mode<synchronous>, transform_indices = @transform_4, window_bounds = array<i64: 16, 5>}, {pipeline_mode = #tpu.pipeline_mode<synchronous>, transform_indices = @transform_5, window_bounds = array<i64: 16, 16>}, {pipeline_mode = #tpu.pipeline_mode<synchronous>, transform_indices = @transform_6, window_bounds = array<i64: 1, 16>}, {pipeline_mode = #tpu.pipeline_mode<synchronous>, transform_indices = @transform_7, window_bounds = array<i64: 8, 16>}]} {
    %c0_i32 = arith.constant 0 : i32
    %0 = arith.cmpi eq, %arg0, %c0_i32 : i32
    %1 = arith.extui %0 : i1 to i32
    %c0_i32_0 = arith.constant 0 : i32
    %2 = arith.cmpi ne, %1, %c0_i32_0 : i32
    scf.if %2 {
      %cst = arith.constant 0.000000e+00 : f32
      %16 = vector.broadcast %cst : f32 to vector<8x5xf32>
      %c0_8 = arith.constant 0 : index
      %c0_9 = arith.constant 0 : index
      %17 = vector.load %arg9[%c0_8, %c0_9] : memref<8x5xf32, #tpu.memory_space<vmem>>, vector<8x5xf32>
      tpu.vector_store %arg9[%c0_8, %c0_9], %16 {strides = array<i32>} : memref<8x5xf32, #tpu.memory_space<vmem>>, vector<8x5xf32>,
      %cst_10 = arith.constant 0.000000e+00 : f32
      %18 = vector.broadcast %cst_10 : f32 to vector<8x16xf32>
      %c0_11 = arith.constant 0 : index
      %c0_12 = arith.constant 0 : index
      %19 = vector.load %arg10[%c0_11, %c0_12] : memref<8x16xf32, #tpu.memory_space<vmem>>, vector<8x16xf32>
      tpu.vector_store %arg10[%c0_11, %c0_12], %18 {strides = array<i32>} : memref<8x16xf32, #tpu.memory_space<vmem>>, vector<8x16xf32>,
      %20 = tpu.iota {dimensions = array<i32: 1>} : vector<8x16xi32>
      %c0_13 = arith.constant 0 : index
      %c0_14 = arith.constant 0 : index
      %21 = vector.load %arg11[%c0_13, %c0_14] : memref<8x16xi32, #tpu.memory_space<vmem>>, vector<8x16xi32>
      tpu.vector_store %arg11[%c0_13, %c0_14], %20 {strides = array<i32>} : memref<8x16xi32, #tpu.memory_space<vmem>>, vector<8x16xi32>,
    } else {
    }
    %c16_i32 = arith.constant 16 : i32
    %3 = arith.muli %arg0, %c16_i32 : i32
    %c0 = arith.constant 0 : index
    %c0_1 = arith.constant 0 : index
    %4 = vector.load %arg3[%c0, %c0_1] : memref<8x1xi32, #tpu.memory_space<vmem>>, vector<8x1xi32>
    %5 = vector.broadcast %3 : i32 to vector<8x1xi32>
    %6 = arith.subi %4, %5 : vector<8x1xi32>
    %c0_2 = arith.constant 0 : index
    %c0_3 = arith.constant 0 : index
    %7 = vector.load %arg4[%c0_2, %c0_3] : memref<8x1xi32, #tpu.memory_space<vmem>>, vector<8x1xi32>
    %8 = vector.broadcast %3 : i32 to vector<8x1xi32>
    %9 = arith.subi %7, %8 : vector<8x1xi32>
    %c0_i32_4 = arith.constant 0 : i32
    %10 = arith.cmpi slt, %arg0, %c0_i32_4 : i32
    %11 = arith.extui %10 : i1 to i32
    %c0_i32_5 = arith.constant 0 : i32
    %12 = arith.cmpi ne, %11, %c0_i32_5 : i32
    scf.if %12 {
      %c0_8 = arith.constant 0 : index
      %c0_9 = arith.constant 0 : index
      %16 = vector.load %arg1[%c0_8, %c0_9] : memref<16x5xf32, #tpu.memory_space<vmem>>, vector<16x5xf32>
      %c0_10 = arith.constant 0 : index
      %c0_11 = arith.constant 0 : index
      %17 = vector.load %arg2[%c0_10, %c0_11] : memref<16x16xf32, #tpu.memory_space<vmem>>, vector<16x16xf32>
      %c0_12 = arith.constant 0 : index
      %c0_13 = arith.constant 0 : index
      %18 = vector.load %arg11[%c0_12, %c0_13] : memref<8x16xi32, #tpu.memory_space<vmem>>, vector<8x16xi32>
      %19 = vector.broadcast %6 : vector<8x1xi32> to vector<8x16xi32>
      %20 = arith.cmpi sge, %18, %19 : vector<8x16xi32>
      %21 = vector.broadcast %9 : vector<8x1xi32> to vector<8x16xi32>
      %22 = arith.cmpi slt, %18, %21 : vector<8x16xi32>
      %23 = arith.andi %20, %22 : vector<8x16xi1>
      %24 = arith.extui %23 : vector<8x16xi1> to vector<8x16xi32>
      %25 = arith.sitofp %24 : vector<8x16xi32> to vector<8x16xf32>
      %c0_14 = arith.constant 0 : index
      %c0_15 = arith.constant 0 : index
      %26 = vector.load %arg9[%c0_14, %c0_15] : memref<8x5xf32, #tpu.memory_space<vmem>>, vector<8x5xf32>
      %cst = arith.constant dense<0.000000e+00> : vector<8x5xf32>
      %27 = tpu.matmul %25, %16, %cst {dimension_numbers = #tpu.dot_dimension_numbers<[1], [0], [0], [1], [0, 0, 1, 1], [], []>} : vector<8x16xf32>, vector<16x5xf32>, vector<8x5xf32> -> vector<8x5xf32>
      %28 = arith.addf %26, %27 : vector<8x5xf32>
      %c0_16 = arith.constant 0 : index
      %c0_17 = arith.constant 0 : index
      %29 = vector.load %arg9[%c0_16, %c0_17] : memref<8x5xf32, #tpu.memory_space<vmem>>, vector<8x5xf32>
      tpu.vector_store %arg9[%c0_16, %c0_17], %28 {strides = array<i32>} : memref<8x5xf32, #tpu.memory_space<vmem>>, vector<8x5xf32>,
      %c0_18 = arith.constant 0 : index
      %c0_19 = arith.constant 0 : index
      %30 = vector.load %arg10[%c0_18, %c0_19] : memref<8x16xf32, #tpu.memory_space<vmem>>, vector<8x16xf32>
      %cst_20 = arith.constant dense<0.000000e+00> : vector<8x16xf32>
      %31 = tpu.matmul %25, %17, %cst_20 {dimension_numbers = #tpu.dot_dimension_numbers<[1], [0], [0], [1], [0, 0, 1, 1], [], []>} : vector<8x16xf32>, vector<16x16xf32>, vector<8x16xf32> -> vector<8x16xf32>
      %32 = arith.addf %30, %31 : vector<8x16xf32>
      %c0_21 = arith.constant 0 : index
      %c0_22 = arith.constant 0 : index
      %33 = vector.load %arg10[%c0_21, %c0_22] : memref<8x16xf32, #tpu.memory_space<vmem>>, vector<8x16xf32>
      tpu.vector_store %arg10[%c0_21, %c0_22], %32 {strides = array<i32>} : memref<8x16xf32, #tpu.memory_space<vmem>>, vector<8x16xf32>,
    } else {
    }
    %c0_i32_6 = arith.constant 0 : i32
    %13 = arith.cmpi eq, %arg0, %c0_i32_6 : i32
    %14 = arith.extui %13 : i1 to i32
    %c0_i32_7 = arith.constant 0 : i32
    %15 = arith.cmpi ne, %14, %c0_i32_7 : i32
    scf.if %15 {
      %16 = tpu.iota {dimensions = array<i32: 0>} : vector<16x1xi32>
      %17 = vector.broadcast %3 : i32 to vector<16x1xi32>
      %18 = arith.addi %17, %16 : vector<16x1xi32>
      %c13_i32 = arith.constant 13 : i32
      %19 = vector.broadcast %c13_i32 : i32 to vector<16x1xi32>
      %20 = arith.cmpi slt, %18, %19 : vector<16x1xi32>
      %c0_8 = arith.constant 0 : index
      %c0_9 = arith.constant 0 : index
      %21 = vector.load %arg1[%c0_8, %c0_9] : memref<16x5xf32, #tpu.memory_space<vmem>>, vector<16x5xf32>
      %c0_10 = arith.constant 0 : index
      %c0_11 = arith.constant 0 : index
      %22 = vector.load %arg2[%c0_10, %c0_11] : memref<16x16xf32, #tpu.memory_space<vmem>>, vector<16x16xf32>
      %cst = arith.constant 0.000000e+00 : f32
      %23 = vector.broadcast %cst : f32 to vector<16x5xf32>
      %24 = vector.shape_cast %20 : vector<16x1xi1> to vector<16x1xi1>
      %25 = vector.broadcast %24 : vector<16x1xi1> to vector<16x5xi1>
      %26 = arith.select %25, %21, %23 : vector<16x5xi1>, vector<16x5xf32>
      %cst_12 = arith.constant 0.000000e+00 : f32
      %27 = vector.broadcast %cst_12 : f32 to vector<16x16xf32>
      %28 = vector.shape_cast %20 : vector<16x1xi1> to vector<16x1xi1>
      %29 = vector.broadcast %28 : vector<16x1xi1> to vector<16x16xi1>
      %30 = arith.select %29, %22, %27 : vector<16x16xi1>, vector<16x16xf32>
      %c0_13 = arith.constant 0 : index
      %c0_14 = arith.constant 0 : index
      %31 = vector.load %arg11[%c0_13, %c0_14] : memref<8x16xi32, #tpu.memory_space<vmem>>, vector<8x16xi32>
      %32 = vector.broadcast %6 : vector<8x1xi32> to vector<8x16xi32>
      %33 = arith.cmpi sge, %31, %32 : vector<8x16xi32>
      %34 = vector.broadcast %9 : vector<8x1xi32> to vector<8x16xi32>
      %35 = arith.cmpi slt, %31, %34 : vector<8x16xi32>
      %36 = arith.andi %33, %35 : vector<8x16xi1>
      %37 = arith.extui %36 : vector<8x16xi1> to vector<8x16xi32>
      %38 = arith.sitofp %37 : vector<8x16xi32> to vector<8x16xf32>
      %c0_15 = arith.constant 0 : index
      %c0_16 = arith.constant 0 : index
      %39 = vector.load %arg9[%c0_15, %c0_16] : memref<8x5xf32, #tpu.memory_space<vmem>>, vector<8x5xf32>
      %cst_17 = arith.constant dense<0.000000e+00> : vector<8x5xf32>
      %40 = tpu.matmul %38, %26, %cst_17 {dimension_numbers = #tpu.dot_dimension_numbers<[1], [0], [0], [1], [0, 0, 1, 1], [], []>} : vector<8x16xf32>, vector<16x5xf32>, vector<8x5xf32> -> vector<8x5xf32>
      %41 = arith.addf %39, %40 : vector<8x5xf32>
      %c0_18 = arith.constant 0 : index
      %c0_19 = arith.constant 0 : index
      %42 = vector.load %arg9[%c0_18, %c0_19] : memref<8x5xf32, #tpu.memory_space<vmem>>, vector<8x5xf32>
      tpu.vector_store %arg9[%c0_18, %c0_19], %41 {strides = array<i32>} : memref<8x5xf32, #tpu.memory_space<vmem>>, vector<8x5xf32>,
      %c0_20 = arith.constant 0 : index
      %c0_21 = arith.constant 0 : index
      %43 = vector.load %arg10[%c0_20, %c0_21] : memref<8x16xf32, #tpu.memory_space<vmem>>, vector<8x16xf32>
      %cst_22 = arith.constant dense<0.000000e+00> : vector<8x16xf32>
      %44 = tpu.matmul %38, %30, %cst_22 {dimension_numbers = #tpu.dot_dimension_numbers<[1], [0], [0], [1], [0, 0, 1, 1], [], []>} : vector<8x16xf32>, vector<16x16xf32>, vector<8x16xf32> -> vector<8x16xf32>
      %45 = arith.addf %43, %44 : vector<8x16xf32>
      %c0_23 = arith.constant 0 : index
      %c0_24 = arith.constant 0 : index
      %46 = vector.load %arg10[%c0_23, %c0_24] : memref<8x16xf32, #tpu.memory_space<vmem>>, vector<8x16xf32>
      tpu.vector_store %arg10[%c0_23, %c0_24], %45 {strides = array<i32>} : memref<8x16xf32, #tpu.memory_space<vmem>>, vector<8x16xf32>,
      %c0_25 = arith.constant 0 : index
      %c0_26 = arith.constant 0 : index
      %47 = vector.load %arg4[%c0_25, %c0_26] : memref<8x1xi32, #tpu.memory_space<vmem>>, vector<8x1xi32>
      %c0_27 = arith.constant 0 : index
      %c0_28 = arith.constant 0 : index
      %48 = vector.load %arg3[%c0_27, %c0_28] : memref<8x1xi32, #tpu.memory_space<vmem>>, vector<8x1xi32>
      %49 = arith.subi %47, %48 : vector<8x1xi32>
      %50 = arith.sitofp %49 : vector<8x1xi32> to vector<8x1xf32>
      %c0_29 = arith.constant 0 : index
      %c0_30 = arith.constant 0 : index
      %51 = vector.load %arg9[%c0_29, %c0_30] : memref<8x5xf32, #tpu.memory_space<vmem>>, vector<8x5xf32>
      %c0_31 = arith.constant 0 : index
      %c0_32 = arith.constant 0 : index
      %52 = vector.load %arg5[%c0_31, %c0_32] : memref<16x5xf32, #tpu.memory_space<vmem>>, vector<16x5xf32>
      %cst_33 = arith.constant dense<0.000000e+00> : vector<8x16xf32>
      %53 = tpu.matmul %51, %52, %cst_33 {dimension_numbers = #tpu.dot_dimension_numbers<[1], [1], [0], [0], [0, 0, 1, 0], [], []>} : vector<8x5xf32>, vector<16x5xf32>, vector<8x16xf32> -> vector<8x16xf32>
      %c0_34 = arith.constant 0 : index
      %c0_35 = arith.constant 0 : index
      %54 = vector.load %arg10[%c0_34, %c0_35] : memref<8x16xf32, #tpu.memory_space<vmem>>, vector<8x16xf32>
      %c0_36 = arith.constant 0 : index
      %c0_37 = arith.constant 0 : index
      %55 = vector.load %arg6[%c0_36, %c0_37] : memref<16x16xf32, #tpu.memory_space<vmem>>, vector<16x16xf32>
      %cst_38 = arith.constant dense<0.000000e+00> : vector<8x16xf32>
      %56 = tpu.matmul %54, %55, %cst_38 {dimension_numbers = #tpu.dot_dimension_numbers<[1], [1], [0], [0], [0, 0, 1, 0], [], []>} : vector<8x16xf32>, vector<16x16xf32>, vector<8x16xf32> -> vector<8x16xf32>
      %57 = arith.addf %53, %56 : vector<8x16xf32>
      %c0_39 = arith.constant 0 : index
      %c0_40 = arith.constant 0 : index
      %58 = vector.load %arg7[%c0_39, %c0_40] : memref<1x16xf32, #tpu.memory_space<vmem>>, vector<1x16xf32>
      %59 = vector.broadcast %50 : vector<8x1xf32> to vector<8x16xf32>
      %60 = vector.broadcast %58 : vector<1x16xf32> to vector<8x16xf32>
      %61 = arith.mulf %59, %60 : vector<8x16xf32>
      %62 = arith.addf %57, %61 : vector<8x16xf32>
      %c0_41 = arith.constant 0 : index
      %c0_42 = arith.constant 0 : index
      %63 = vector.load %arg8[%c0_41, %c0_42] : memref<8x16xf32, #tpu.memory_space<vmem>>, vector<8x16xf32>
      tpu.vector_store %arg8[%c0_41, %c0_42], %62 {strides = array<i32>} : memref<8x16xf32, #tpu.memory_space<vmem>>, vector<8x16xf32>,
    } else {
    }
    return
  }
  func.func @transform_0(%arg0: i32) -> (i32, i32) {
    %c0_i32 = arith.constant 0 : i32
    %c0_i32_0 = arith.constant 0 : i32
    return %arg0, %c0_i32 : i32, i32
  }
  func.func @transform_1(%arg0: i32) -> (i32, i32) {
    %c0_i32 = arith.constant 0 : i32
    %c0_i32_0 = arith.constant 0 : i32
    return %arg0, %c0_i32 : i32, i32
  }
  func.func @transform_2(%arg0: i32) -> (i32, i32) {
    %c0_i32 = arith.constant 0 : i32
    %c0_i32_0 = arith.constant 0 : i32
    %c0_i32_1 = arith.constant 0 : i32
    return %c0_i32, %c0_i32_0 : i32, i32
  }
  func.func @transform_3(%arg0: i32) -> (i32, i32) {
    %c0_i32 = arith.constant 0 : i32
    %c0_i32_0 = arith.constant 0 : i32
    %c0_i32_1 = arith.constant 0 : i32
    return %c0_i32, %c0_i32_0 : i32, i32
  }
  func.func @transform_4(%arg0: i32) -> (i32, i32) {
    %c0_i32 = arith.constant 0 : i32
    %c0_i32_0 = arith.constant 0 : i32
    %c0_i32_1 = arith.constant 0 : i32
    return %c0_i32, %c0_i32_0 : i32, i32
  }
  func.func @transform_5(%arg0: i32) -> (i32, i32) {
    %c0_i32 = arith.constant 0 : i32
    %c0_i32_0 = arith.constant 0 : i32
    %c0_i32_1 = arith.constant 0 : i32
    return %c0_i32, %c0_i32_0 : i32, i32
  }
  func.func @transform_6(%arg0: i32) -> (i32, i32) {
    %c0_i32 = arith.constant 0 : i32
    %c0_i32_0 = arith.constant 0 : i32
    %c0_i32_1 = arith.constant 0 : i32
    return %c0_i32, %c0_i32_0 : i32, i32
  }
  func.func @transform_7(%arg0: i32) -> (i32, i32) {
    %c0_i32 = arith.constant 0 : i32
    %c0_i32_0 = arith.constant 0 : i32
    %c0_i32_1 = arith.constant 0 : i32
    return %c0_i32, %c0_i32_0 : i32, i32
  }
}

</mosaic_0001>

<llo_original>
// kernel: tpu_custom_call.1
$region0: #{tpu_custom_call.1}
  #allocation0 [shape = 'u32[]', space=smem, size = 0x4, offset = 0x4, fixed_abs, tag = 'smem constant byte address 0x4 - core index']
  #allocation1 [shape = 'u32[144,128]{1,0:T(1,128)}', space=vmem, size = 0x12000, scoped, tag = 'internal scratch']
  #allocation2 [shape = 'f32[8,5]{1,0:T(8,128)}', space=vmem, size = 0x1000, scoped, tag = 'scratch operand']
  #allocation3 [shape = 'f32[8,16]{1,0:T(8,128)}', space=vmem, size = 0x1000, scoped, tag = 'scratch operand']
  #allocation4 [shape = 's32[8,16]{1,0:T(8,128)}', space=vmem, size = 0x1000, scoped, tag = 'scratch operand']
  %s0 = inlined_call_operand.vmem [shape: f32[13,5], index: 0, kind: input, shape index: {}]
  %s1 = inlined_call_operand.vmem [shape: f32[13,16], index: 1, kind: input, shape index: {}]
  %s2 = inlined_call_operand.vmem [shape: s32[8,1], index: 2, kind: input, shape index: {}]
  %s3 = inlined_call_operand.vmem [shape: s32[8,1], index: 3, kind: input, shape index: {}]
  %s4 = inlined_call_operand.vmem [shape: f32[16,5], index: 4, kind: input, shape index: {}]
  %s5 = inlined_call_operand.vmem [shape: f32[16,16], index: 5, kind: input, shape index: {}]
  %s6 = inlined_call_operand.vmem [shape: f32[1,16], index: 6, kind: input, shape index: {}]
  %s7 = inlined_call_operand.hbm [shape: f32[8,16], index: 7, kind: output, shape index: {}]
  %s8 = sld [smem:[#allocation0]]
  $region50: #{tpu_custom_call.1} parent=0
    _
  %s10 = ssub.s32 1, %s8
  %s11 = scalar_select 0, %s10, %s8
  $region1: #{tpu_custom_call.1} parent=0
    #allocation5 [shape = 'u8[4096]{0}', space=vmem, size = 0x1000, scoped, tag = 'output window, operand 0, single buffered']
    #allocation6 [shape = 's32[1]{0}', space=sflag, size = 0x4, scoped, tag = 'scoped memory for tpu_custom_call.1']
    %12 = vsyncpa [#allocation6], 0
    // Predicated region
    $region2: #{tpu_custom_call.1} parent=1 // pred_check
      _
    $region3: #{tpu_custom_call.1} parent=1 // pred_check_branch
      %14 = sbr.rel (0) target = $region5
    $region4: #{tpu_custom_call.1} parent=1 // pred_region
      _
    $region5: #{tpu_custom_call.1} parent=1 // pred_fallthru
      _
    // Predicated region
    $region6: #{tpu_custom_call.1} parent=1 // pred_check
      _
    $region7: #{tpu_custom_call.1} parent=1 // pred_check_branch
      %16 = sbr.rel (0) target = $region9
    $region8: #{tpu_custom_call.1} parent=1 // pred_region
      _
    $region9: #{tpu_custom_call.1} parent=1 // pred_fallthru
      _
    // Predicated region
    $region10: #{tpu_custom_call.1} parent=1 // pred_check
      _
    $region11: #{tpu_custom_call.1} parent=1 // pred_check_branch
      %18 = sbr.rel (0) target = $region13
    $region12: #{tpu_custom_call.1} parent=1 // pred_region
      _
    $region13: #{tpu_custom_call.1} parent=1 // pred_fallthru
      _
    // Predicated region
    $region14: #{tpu_custom_call.1} parent=1 // pred_check
      _
    $region15: #{tpu_custom_call.1} parent=1 // pred_check_branch
      %20 = sbr.rel (0) target = $region17
    $region16: #{tpu_custom_call.1} parent=1 // pred_region
      _
    $region17: #{tpu_custom_call.1} parent=1 // pred_fallthru
      _
    // Predicated region
    $region18: #{tpu_custom_call.1} parent=1 // pred_check
      _
    $region19: #{tpu_custom_call.1} parent=1 // pred_check_branch
      %22 = sbr.rel (0) target = $region21
    $region20: #{tpu_custom_call.1} parent=1 // pred_region
      _
    $region21: #{tpu_custom_call.1} parent=1 // pred_fallthru
      _
    // Predicated region
    $region22: #{tpu_custom_call.1} parent=1 // pred_check
      _
    $region23: #{tpu_custom_call.1} parent=1 // pred_check_branch
      %24 = sbr.rel (0) target = $region25
    $region24: #{tpu_custom_call.1} parent=1 // pred_region
      _
    $region25: #{tpu_custom_call.1} parent=1 // pred_fallthru
      _
    // Predicated region
    $region26: #{tpu_custom_call.1} parent=1 // pred_check
      _
    $region27: #{tpu_custom_call.1} parent=1 // pred_check_branch
      %26 = sbr.rel (0) target = $region29
    $region28: #{tpu_custom_call.1} parent=1 // pred_region
      _
    $region29: #{tpu_custom_call.1} parent=1 // pred_fallthru
      _
    %p27 = scmp.eq.s32.totalorder 0, 0
    // Predicated region
    $region30: #{tpu_custom_call.1} parent=1 // pred_check
      %p28 = pneg %p27
    $region31: #{tpu_custom_call.1} parent=1 // pred_check_branch
      %30 = sbr.rel (%p28) target = $region33
    $region32: #{tpu_custom_call.1} parent=1 // pred_region
      %vm31 = vcmask 39936
      %32 = vst.msk [vmem:[#allocation2] sm:$0xff] %vm31, 0.0
      %vm33 = vcmask 130048
      %34 = vst.msk [vmem:[#allocation3] sm:$0xff] %vm33, 0.0
      %v35 = vlaneseq
      %v36 = vand.u32 %v35, 127
      %37 = vst.msk [vmem:[#allocation4] sm:$0xff] %vm33, %v36
    $region33: #{tpu_custom_call.1} parent=1 // pred_fallthru
      _
    %s38 = smul.u32 0, 16
    %v39 = vld [vmem:[%s2] sm:$0xff]
    %v40 = vstv %s38
    %v41 = vsub.s32 %v39, %v40
    %v42 = vld [vmem:[%s3] sm:$0xff]
    %v43 = vsub.s32 %v42, %v40
    %p44 = scmp.lt.s32.totalorder 0, 0
    // Predicated region
    $region34: #{tpu_custom_call.1} parent=1 // pred_check
      %p45 = pneg %p44
    $region35: #{tpu_custom_call.1} parent=1 // pred_check_branch
      %47 = sbr.rel (%p45) target = $region37
    $region36: #{tpu_custom_call.1} parent=1 // pred_region
      %v48 = vld [vmem:[%s0] sm:$0xff]
      %v49 = vld [vmem:[%s0 + $0x8] sm:$0xff]
      %v50 = vld [vmem:[%s1] sm:$0xff]
      %v51 = vld [vmem:[%s1 + $0x8] sm:$0xff]
      %v52 = vld [vmem:[#allocation4] sm:$0xff]
      %53 = vset.pattern.permute.xlu0 0
      %54 = vperm.xlu0 %53, %v41
      %v55 = vpop.permute.xlu0 %54
      %vm56 = vcmp.ge.s32.totalorder %v52, %v55
      %57 = vset.pattern.permute.xlu0 0
      %58 = vperm.xlu0 %57, %v43
      %v59 = vpop.permute.xlu0 %58
      %vm60 = vcmp.lt.s32.totalorder %v52, %v59
      %vm61 = vmand %vm56, %vm60
      %v62 = vsel %vm61, 1, 0
      %v63 = vcvt.s32.f32 %v62
      %v64 = vld [vmem:[#allocation2] sm:$0xff]
      %vm65 = vcmask 130048
      %v67 = vsel %vm65, %v63, 0
      %69 = vmatprep.subr.mxu0 0.0
      %70 = vmatpush1.msra.mxu0 %v48
      %71 = vmatprep.subr.mxu0 0.0
      %72 = vmatpush1.msra.mxu0 %v49
      %73 = vmatprep.subr.mxu0 0.0
      %74 = vmatpush1.msra.mxu0 0.0
      %75 = vmatprep.subr.mxu0 0.0
      %76 = vmatpush1.msra.mxu0 0.0
      %77 = vmatprep.subr.mxu0 0.0
      %78 = vmatpush1.msra.mxu0 0.0
      %79 = vmatprep.subr.mxu0 0.0
      %80 = vmatpush1.msra.mxu0 0.0
      %81 = vmatprep.subr.mxu0 0.0
      %82 = vmatpush1.msra.mxu0 0.0
      %83 = vmatprep.subr.mxu0 0.0
      %84 = vmatpush1.msra.mxu0 0.0
      %85 = vmatprep.subr.mxu0 0.0
      %86 = vmatpush1.msra.mxu0 0.0
      %87 = vmatprep.subr.mxu0 0.0
      %88 = vmatpush1.msra.mxu0 0.0
      %89 = vmatprep.subr.mxu0 0.0
      %90 = vmatpush1.msra.mxu0 0.0
      %91 = vmatprep.subr.mxu0 0.0
      %92 = vmatpush1.msra.mxu0 0.0
      %93 = vmatprep.subr.mxu0 0.0
      %94 = vmatpush1.msra.mxu0 0.0
      %95 = vmatprep.subr.mxu0 0.0
      %96 = vmatpush1.msra.mxu0 0.0
      %97 = vmatprep.subr.mxu0 0.0
      %98 = vmatpush1.msra.mxu0 0.0
      %99 = vmatprep.subr.mxu0 0.0
      %100 = vmatpush1.msra.mxu0 0.0
      %101 = vmatprep.subr.mxu0 0.0
      %102 = vmatpush1.msra.mxu0 0.0
      %103 = vmatprep.subr.mxu0 0.0
      %104 = vmatpush1.msra.mxu0 0.0
      %105 = vmatprep.subr.mxu0 0.0
      %106 = vmatpush1.msra.mxu0 0.0
      %107 = vmatprep.subr.mxu0 0.0
      %108 = vmatpush1.msra.mxu0 0.0
      %109 = vmatprep.subr.mxu0 0.0
      %110 = vmatpush1.msra.mxu0 0.0
      %111 = vmatprep.subr.mxu0 0.0
      %112 = vmatpush1.msra.mxu0 0.0
      %113 = vmatprep.subr.mxu0 0.0
      %114 = vmatpush1.msra.mxu0 0.0
      %115 = vmatprep.subr.mxu0 0.0
      %116 = vmatpush1.msra.mxu0 0.0
      %117 = vmatprep.subr.mxu0 0.0
      %118 = vmatpush1.msra.mxu0 0.0
      %119 = vmatprep.subr.mxu0 0.0
      %120 = vmatpush1.msra.mxu0 0.0
      %121 = vmatprep.subr.mxu0 0.0
      %122 = vmatpush1.msra.mxu0 0.0
      %123 = vmatprep.subr.mxu0 0.0
      %124 = vmatpush1.msra.mxu0 0.0
      %125 = vmatprep.subr.mxu0 0.0
      %126 = vmatpush1.msra.mxu0 0.0
      %127 = vmatprep.subr.mxu0 0.0
      %128 = vmatpush1.msra.mxu0 0.0
      %129 = vmatprep.subr.mxu0 0.0
      %130 = vmatpush1.msra.mxu0 0.0
      %131 = vmatprep.subr.mxu0 0.0
      %132 = vmatpush1.msra.mxu0 0.0
      %133 = vmatprep.mubr.f32.mxu0 0.0
      %134 = vmatmul.mubr.f32.gmra.mrb[0].mxu0 %v67
      %v135 = vpop.f32.mrb[0].mxu0
      %v136 = vadd.f32 0.0, %v135
      %v137 = vpop.f32.mrb[0].mxu0
      %138 = vdwg.mxu0
      %v139 = vadd.f32 %v64, %v136
      %vm140 = vcmask 39936
      %141 = vst.msk [vmem:[#allocation2] sm:$0xff] %vm140, %v139
      %v142 = vld [vmem:[#allocation3] sm:$0xff]
      %143 = vmatprep.subr.mxu0 0.0
      %144 = vmatpush1.msra.mxu0 %v50
      %145 = vmatprep.subr.mxu0 0.0
      %146 = vmatpush1.msra.mxu0 %v51
      %147 = vmatprep.subr.mxu0 0.0
      %148 = vmatpush1.msra.mxu0 0.0
      %149 = vmatprep.subr.mxu0 0.0
      %150 = vmatpush1.msra.mxu0 0.0
      %151 = vmatprep.subr.mxu0 0.0
      %152 = vmatpush1.msra.mxu0 0.0
      %153 = vmatprep.subr.mxu0 0.0
      %154 = vmatpush1.msra.mxu0 0.0
      %155 = vmatprep.subr.mxu0 0.0
      %156 = vmatpush1.msra.mxu0 0.0
      %157 = vmatprep.subr.mxu0 0.0
      %158 = vmatpush1.msra.mxu0 0.0
      %159 = vmatprep.subr.mxu0 0.0
      %160 = vmatpush1.msra.mxu0 0.0
      %161 = vmatprep.subr.mxu0 0.0
      %162 = vmatpush1.msra.mxu0 0.0
      %163 = vmatprep.subr.mxu0 0.0
      %164 = vmatpush1.msra.mxu0 0.0
      %165 = vmatprep.subr.mxu0 0.0
      %166 = vmatpush1.msra.mxu0 0.0
      %167 = vmatprep.subr.mxu0 0.0
      %168 = vmatpush1.msra.mxu0 0.0
      %169 = vmatprep.subr.mxu0 0.0
      %170 = vmatpush1.msra.mxu0 0.0
      %171 = vmatprep.subr.mxu0 0.0
      %172 = vmatpush1.msra.mxu0 0.0
      %173 = vmatprep.subr.mxu0 0.0
      %174 = vmatpush1.msra.mxu0 0.0
      %175 = vmatprep.subr.mxu0 0.0
      %176 = vmatpush1.msra.mxu0 0.0
      %177 = vmatprep.subr.mxu0 0.0
      %178 = vmatpush1.msra.mxu0 0.0
      %179 = vmatprep.subr.mxu0 0.0
      %180 = vmatpush1.msra.mxu0 0.0
      %181 = vmatprep.subr.mxu0 0.0
      %182 = vmatpush1.msra.mxu0 0.0
      %183 = vmatprep.subr.mxu0 0.0
      %184 = vmatpush1.msra.mxu0 0.0
      %185 = vmatprep.subr.mxu0 0.0
      %186 = vmatpush1.msra.mxu0 0.0
      %187 = vmatprep.subr.mxu0 0.0
      %188 = vmatpush1.msra.mxu0 0.0
      %189 = vmatprep.subr.mxu0 0.0
      %190 = vmatpush1.msra.mxu0 0.0
      %191 = vmatprep.subr.mxu0 0.0
      %192 = vmatpush1.msra.mxu0 0.0
      %193 = vmatprep.subr.mxu0 0.0
      %194 = vmatpush1.msra.mxu0 0.0
      %195 = vmatprep.subr.mxu0 0.0
      %196 = vmatpush1.msra.mxu0 0.0
      %197 = vmatprep.subr.mxu0 0.0
      %198 = vmatpush1.msra.mxu0 0.0
      %199 = vmatprep.subr.mxu0 0.0
      %200 = vmatpush1.msra.mxu0 0.0
      %201 = vmatprep.subr.mxu0 0.0
      %202 = vmatpush1.msra.mxu0 0.0
      %203 = vmatprep.subr.mxu0 0.0
      %204 = vmatpush1.msra.mxu0 0.0
      %205 = vmatprep.subr.mxu0 0.0
      %206 = vmatpush1.msra.mxu0 0.0
      %207 = vmatprep.mubr.f32.mxu0 0.0
      %208 = vmatmul.mubr.f32.gmra.mrb[0].mxu0 %v67
      %v209 = vpop.f32.mrb[0].mxu0
      %v210 = vadd.f32 0.0, %v209
      %v211 = vpop.f32.mrb[0].mxu0
      %212 = vdwg.mxu0
      %v213 = vadd.f32 %v142, %v210
      %214 = vst.msk [vmem:[#allocation3] sm:$0xff] %vm65, %v213
    $region37: #{tpu_custom_call.1} parent=1 // pred_fallthru
      _
    // Predicated region
    $region38: #{tpu_custom_call.1} parent=1 // pred_check
      %p215 = pneg %p27
    $region39: #{tpu_custom_call.1} parent=1 // pred_check_branch
      %217 = sbr.rel (%p215) target = $region41
    $region40: #{tpu_custom_call.1} parent=1 // pred_region
      %v218 = vlaneseq
      %v219 = vshrl.u32 %v218, 7
      %v220 = vadd.s32 %v219, 8
      %v221 = vadd.s32 %v40, %v219
      %v222 = vadd.s32 %v40, %v220
      %vm223 = vcmp.lt.s32.totalorder %v221, 13
      %vm224 = vcmp.lt.s32.totalorder %v222, 13
      %v225 = vld [vmem:[%s0] sm:$0xff]
      %v226 = vld [vmem:[%s0 + $0x8] sm:$0xff]
      %v227 = vld [vmem:[%s1] sm:$0xff]
      %v228 = vld [vmem:[%s1 + $0x8] sm:$0xff]
      %v229 = vsel %vm223, 1, 0
      %v230 = vsel %vm224, 1, 0
      %vm231 = vcmp.eq.s32.totalorder %v229, 1
      %vm232 = vcmp.eq.s32.totalorder %v230, 1
      %v233 = vsel %vm231, %v225, 0.0
      %v234 = vsel %vm232, %v226, 0.0
      %v235 = vsel %vm231, %v227, 0.0
      %v236 = vsel %vm232, %v228, 0.0
      %v237 = vld [vmem:[#allocation4] sm:$0xff]
      %238 = vset.pattern.permute.xlu0 0
      %239 = vperm.xlu0 %238, %v41
      %v240 = vpop.permute.xlu0 %239
      %vm241 = vcmp.ge.s32.totalorder %v237, %v240
      %242 = vset.pattern.permute.xlu0 0
      %243 = vperm.xlu0 %242, %v43
      %v244 = vpop.permute.xlu0 %243
      %vm245 = vcmp.lt.s32.totalorder %v237, %v244
      %vm246 = vmand %vm241, %vm245
      %v247 = vsel %vm246, 1, 0
      %v248 = vcvt.s32.f32 %v247
      %v249 = vld [vmem:[#allocation2] sm:$0xff]
      %vm250 = vcmask 130048
      %v252 = vsel %vm250, %v248, 0
      %254 = vmatprep.subr.mxu0 0.0
      %255 = vmatpush1.msra.mxu0 %v233
      %256 = vmatprep.subr.mxu0 0.0
      %257 = vmatpush1.msra.mxu0 %v234
      %258 = vmatprep.subr.mxu0 0.0
      %259 = vmatpush1.msra.mxu0 0.0
      %260 = vmatprep.subr.mxu0 0.0
      %261 = vmatpush1.msra.mxu0 0.0
      %262 = vmatprep.subr.mxu0 0.0
      %263 = vmatpush1.msra.mxu0 0.0
      %264 = vmatprep.subr.mxu0 0.0
      %265 = vmatpush1.msra.mxu0 0.0
      %266 = vmatprep.subr.mxu0 0.0
      %267 = vmatpush1.msra.mxu0 0.0
      %268 = vmatprep.subr.mxu0 0.0
      %269 = vmatpush1.msra.mxu0 0.0
      %270 = vmatprep.subr.mxu0 0.0
      %271 = vmatpush1.msra.mxu0 0.0
      %272 = vmatprep.subr.mxu0 0.0
      %273 = vmatpush1.msra.mxu0 0.0
      %274 = vmatprep.subr.mxu0 0.0
      %275 = vmatpush1.msra.mxu0 0.0
      %276 = vmatprep.subr.mxu0 0.0
      %277 = vmatpush1.msra.mxu0 0.0
      %278 = vmatprep.subr.mxu0 0.0
      %279 = vmatpush1.msra.mxu0 0.0
      %280 = vmatprep.subr.mxu0 0.0
      %281 = vmatpush1.msra.mxu0 0.0
      %282 = vmatprep.subr.mxu0 0.0
      %283 = vmatpush1.msra.mxu0 0.0
      %284 = vmatprep.subr.mxu0 0.0
      %285 = vmatpush1.msra.mxu0 0.0
      %286 = vmatprep.subr.mxu0 0.0
      %287 = vmatpush1.msra.mxu0 0.0
      %288 = vmatprep.subr.mxu0 0.0
      %289 = vmatpush1.msra.mxu0 0.0
      %290 = vmatprep.subr.mxu0 0.0
      %291 = vmatpush1.msra.mxu0 0.0
      %292 = vmatprep.subr.mxu0 0.0
      %293 = vmatpush1.msra.mxu0 0.0
      %294 = vmatprep.subr.mxu0 0.0
      %295 = vmatpush1.msra.mxu0 0.0
      %296 = vmatprep.subr.mxu0 0.0
      %297 = vmatpush1.msra.mxu0 0.0
      %298 = vmatprep.subr.mxu0 0.0
      %299 = vmatpush1.msra.mxu0 0.0
      %300 = vmatprep.subr.mxu0 0.0
      %301 = vmatpush1.msra.mxu0 0.0
      %302 = vmatprep.subr.mxu0 0.0
      %303 = vmatpush1.msra.mxu0 0.0
      %304 = vmatprep.subr.mxu0 0.0
      %305 = vmatpush1.msra.mxu0 0.0
      %306 = vmatprep.subr.mxu0 0.0
      %307 = vmatpush1.msra.mxu0 0.0
      %308 = vmatprep.subr.mxu0 0.0
      %309 = vmatpush1.msra.mxu0 0.0
      %310 = vmatprep.subr.mxu0 0.0
      %311 = vmatpush1.msra.mxu0 0.0
      %312 = vmatprep.subr.mxu0 0.0
      %313 = vmatpush1.msra.mxu0 0.0
      %314 = vmatprep.subr.mxu0 0.0
      %315 = vmatpush1.msra.mxu0 0.0
      %316 = vmatprep.subr.mxu0 0.0
      %317 = vmatpush1.msra.mxu0 0.0
      %318 = vmatprep.mubr.f32.mxu0 0.0
      %319 = vmatmul.mubr.f32.gmra.mrb[0].mxu0 %v252
      %v320 = vpop.f32.mrb[0].mxu0
      %v321 = vadd.f32 0.0, %v320
      %v322 = vpop.f32.mrb[0].mxu0
      %323 = vdwg.mxu0
      %v324 = vadd.f32 %v249, %v321
      %vm325 = vcmask 39936
      %326 = vst.msk [vmem:[#allocation2] sm:$0xff] %vm325, %v324
      %v327 = vld [vmem:[#allocation3] sm:$0xff]
      %328 = vmatprep.subr.mxu0 0.0
      %329 = vmatpush1.msra.mxu0 %v235
      %330 = vmatprep.subr.mxu0 0.0
      %331 = vmatpush1.msra.mxu0 %v236
      %332 = vmatprep.subr.mxu0 0.0
      %333 = vmatpush1.msra.mxu0 0.0
      %334 = vmatprep.subr.mxu0 0.0
      %335 = vmatpush1.msra.mxu0 0.0
      %336 = vmatprep.subr.mxu0 0.0
      %337 = vmatpush1.msra.mxu0 0.0
      %338 = vmatprep.subr.mxu0 0.0
      %339 = vmatpush1.msra.mxu0 0.0
      %340 = vmatprep.subr.mxu0 0.0
      %341 = vmatpush1.msra.mxu0 0.0
      %342 = vmatprep.subr.mxu0 0.0
      %343 = vmatpush1.msra.mxu0 0.0
      %344 = vmatprep.subr.mxu0 0.0
      %345 = vmatpush1.msra.mxu0 0.0
      %346 = vmatprep.subr.mxu0 0.0
      %347 = vmatpush1.msra.mxu0 0.0
      %348 = vmatprep.subr.mxu0 0.0
      %349 = vmatpush1.msra.mxu0 0.0
      %350 = vmatprep.subr.mxu0 0.0
      %351 = vmatpush1.msra.mxu0 0.0
      %352 = vmatprep.subr.mxu0 0.0
      %353 = vmatpush1.msra.mxu0 0.0
      %354 = vmatprep.subr.mxu0 0.0
      %355 = vmatpush1.msra.mxu0 0.0
      %356 = vmatprep.subr.mxu0 0.0
      %357 = vmatpush1.msra.mxu0 0.0
      %358 = vmatprep.subr.mxu0 0.0
      %359 = vmatpush1.msra.mxu0 0.0
      %360 = vmatprep.subr.mxu0 0.0
      %361 = vmatpush1.msra.mxu0 0.0
      %362 = vmatprep.subr.mxu0 0.0
      %363 = vmatpush1.msra.mxu0 0.0
      %364 = vmatprep.subr.mxu0 0.0
      %365 = vmatpush1.msra.mxu0 0.0
      %366 = vmatprep.subr.mxu0 0.0
      %367 = vmatpush1.msra.mxu0 0.0
      %368 = vmatprep.subr.mxu0 0.0
      %369 = vmatpush1.msra.mxu0 0.0
      %370 = vmatprep.subr.mxu0 0.0
      %371 = vmatpush1.msra.mxu0 0.0
      %372 = vmatprep.subr.mxu0 0.0
      %373 = vmatpush1.msra.mxu0 0.0
      %374 = vmatprep.subr.mxu0 0.0
      %375 = vmatpush1.msra.mxu0 0.0
      %376 = vmatprep.subr.mxu0 0.0
      %377 = vmatpush1.msra.mxu0 0.0
      %378 = vmatprep.subr.mxu0 0.0
      %379 = vmatpush1.msra.mxu0 0.0
      %380 = vmatprep.subr.mxu0 0.0
      %381 = vmatpush1.msra.mxu0 0.0
      %382 = vmatprep.subr.mxu0 0.0
      %383 = vmatpush1.msra.mxu0 0.0
      %384 = vmatprep.subr.mxu0 0.0
      %385 = vmatpush1.msra.mxu0 0.0
      %386 = vmatprep.subr.mxu0 0.0
      %387 = vmatpush1.msra.mxu0 0.0
      %388 = vmatprep.subr.mxu0 0.0
      %389 = vmatpush1.msra.mxu0 0.0
      %390 = vmatprep.subr.mxu0 0.0
      %391 = vmatpush1.msra.mxu0 0.0
      %392 = vmatprep.mubr.f32.mxu0 0.0
      %393 = vmatmul.mubr.f32.gmra.mrb[0].mxu0 %v252
      %v394 = vpop.f32.mrb[0].mxu0
      %v395 = vadd.f32 0.0, %v394
      %v396 = vpop.f32.mrb[0].mxu0
      %397 = vdwg.mxu0
      %v398 = vadd.f32 %v327, %v395
      %399 = vst.msk [vmem:[#allocation3] sm:$0xff] %vm250, %v398
      %v400 = vld [vmem:[%s3] sm:$0xff]
      %v401 = vld [vmem:[%s2] sm:$0xff]
      %v402 = vsub.s32 %v400, %v401
      %v403 = vcvt.s32.f32 %v402
      %v404 = vld [vmem:[#allocation2] sm:$0xff]
      %v405 = vld [vmem:[%s4] sm:$0xff]
      %v406 = vld [vmem:[%s4 + $0x8] sm:$0xff]
      %v407 = vld [vmem:[#allocation3] sm:$0xff]
      %v408 = vld [vmem:[%s5] sm:$0xff]
      %v409 = vld [vmem:[%s5 + $0x8] sm:$0xff]
      %v411 = vsel %vm250, %v407, 0
      %v414 = vsel %vm250, %v408, 0
      %v417 = vsel %vm250, %v409, 0
      %419 = vmatprep.subr.mxu0 0.0
      %420 = vmatpush1.xpose.msra.mxu0 %v414
      %421 = vmatprep.subr.mxu0 0.0
      %422 = vmatpush1.xpose.msra.mxu0 %v417
      %423 = vmatprep.subr.mxu0 0.0
      %424 = vmatpush1.xpose.msra.mxu0 0.0
      %425 = vmatprep.subr.mxu0 0.0
      %426 = vmatpush1.xpose.msra.mxu0 0.0
      %427 = vmatprep.subr.mxu0 0.0
      %428 = vmatpush1.xpose.msra.mxu0 0.0
      %429 = vmatprep.subr.mxu0 0.0
      %430 = vmatpush1.xpose.msra.mxu0 0.0
      %431 = vmatprep.subr.mxu0 0.0
      %432 = vmatpush1.xpose.msra.mxu0 0.0
      %433 = vmatprep.subr.mxu0 0.0
      %434 = vmatpush1.xpose.msra.mxu0 0.0
      %435 = vmatprep.subr.mxu0 0.0
      %436 = vmatpush1.xpose.msra.mxu0 0.0
      %437 = vmatprep.subr.mxu0 0.0
      %438 = vmatpush1.xpose.msra.mxu0 0.0
      %439 = vmatprep.subr.mxu0 0.0
      %440 = vmatpush1.xpose.msra.mxu0 0.0
      %441 = vmatprep.subr.mxu0 0.0
      %442 = vmatpush1.xpose.msra.mxu0 0.0
      %443 = vmatprep.subr.mxu0 0.0
      %444 = vmatpush1.xpose.msra.mxu0 0.0
      %445 = vmatprep.subr.mxu0 0.0
      %446 = vmatpush1.xpose.msra.mxu0 0.0
      %447 = vmatprep.subr.mxu0 0.0
      %448 = vmatpush1.xpose.msra.mxu0 0.0
      %449 = vmatprep.subr.mxu0 0.0
      %450 = vmatpush1.xpose.msra.mxu0 0.0
      %451 = vmatprep.subr.mxu0 0.0
      %452 = vmatpush1.xpose.msra.mxu0 0.0
      %453 = vmatprep.subr.mxu0 0.0
      %454 = vmatpush1.xpose.msra.mxu0 0.0
      %455 = vmatprep.subr.mxu0 0.0
      %456 = vmatpush1.xpose.msra.mxu0 0.0
      %457 = vmatprep.subr.mxu0 0.0
      %458 = vmatpush1.xpose.msra.mxu0 0.0
      %459 = vmatprep.subr.mxu0 0.0
      %460 = vmatpush1.xpose.msra.mxu0 0.0
      %461 = vmatprep.subr.mxu0 0.0
      %462 = vmatpush1.xpose.msra.mxu0 0.0
      %463 = vmatprep.subr.mxu0 0.0
      %464 = vmatpush1.xpose.msra.mxu0 0.0
      %465 = vmatprep.subr.mxu0 0.0
      %466 = vmatpush1.xpose.msra.mxu0 0.0
      %467 = vmatprep.subr.mxu0 0.0
      %468 = vmatpush1.xpose.msra.mxu0 0.0
      %469 = vmatprep.subr.mxu0 0.0
      %470 = vmatpush1.xpose.msra.mxu0 0.0
      %471 = vmatprep.subr.mxu0 0.0
      %472 = vmatpush1.xpose.msra.mxu0 0.0
      %473 = vmatprep.subr.mxu0 0.0
      %474 = vmatpush1.xpose.msra.mxu0 0.0
      %475 = vmatprep.subr.mxu0 0.0
      %476 = vmatpush1.xpose.msra.mxu0 0.0
      %477 = vmatprep.subr.mxu0 0.0
      %478 = vmatpush1.xpose.msra.mxu0 0.0
      %479 = vmatprep.subr.mxu0 0.0
      %480 = vmatpush1.xpose.msra.mxu0 0.0
      %481 = vmatprep.subr.mxu0 0.0
      %482 = vmatpush1.xpose.msra.mxu0 0.0
      %483 = vmatprep.mubr.f32.mxu0 0.0
      %484 = vmatmul.mubr.f32.gmra.mrb[0].mxu0 %v411
      %v485 = vpop.f32.mrb[0].mxu0
      %v486 = vadd.f32 0.0, %v485
      %v487 = vpop.f32.mrb[0].mxu0
      %488 = vdwg.mxu0
      %v490 = vsel %vm325, %v404, 0
      %v493 = vsel %vm325, %v405, 0
      %v496 = vsel %vm325, %v406, 0
      %498 = vmatprep.subr.mxu0 0.0
      %499 = vmatpush1.xpose.msra.mxu0 %v493
      %500 = vmatprep.subr.mxu0 0.0
      %501 = vmatpush1.xpose.msra.mxu0 %v496
      %502 = vmatprep.subr.mxu0 0.0
      %503 = vmatpush1.xpose.msra.mxu0 0.0
      %504 = vmatprep.subr.mxu0 0.0
      %505 = vmatpush1.xpose.msra.mxu0 0.0
      %506 = vmatprep.subr.mxu0 0.0
      %507 = vmatpush1.xpose.msra.mxu0 0.0
      %508 = vmatprep.subr.mxu0 0.0
      %509 = vmatpush1.xpose.msra.mxu0 0.0
      %510 = vmatprep.subr.mxu0 0.0
      %511 = vmatpush1.xpose.msra.mxu0 0.0
      %512 = vmatprep.subr.mxu0 0.0
      %513 = vmatpush1.xpose.msra.mxu0 0.0
      %514 = vmatprep.subr.mxu0 0.0
      %515 = vmatpush1.xpose.msra.mxu0 0.0
      %516 = vmatprep.subr.mxu0 0.0
      %517 = vmatpush1.xpose.msra.mxu0 0.0
      %518 = vmatprep.subr.mxu0 0.0
      %519 = vmatpush1.xpose.msra.mxu0 0.0
      %520 = vmatprep.subr.mxu0 0.0
      %521 = vmatpush1.xpose.msra.mxu0 0.0
      %522 = vmatprep.subr.mxu0 0.0
      %523 = vmatpush1.xpose.msra.mxu0 0.0
      %524 = vmatprep.subr.mxu0 0.0
      %525 = vmatpush1.xpose.msra.mxu0 0.0
      %526 = vmatprep.subr.mxu0 0.0
      %527 = vmatpush1.xpose.msra.mxu0 0.0
      %528 = vmatprep.subr.mxu0 0.0
      %529 = vmatpush1.xpose.msra.mxu0 0.0
      %530 = vmatprep.subr.mxu0 0.0
      %531 = vmatpush1.xpose.msra.mxu0 0.0
      %532 = vmatprep.subr.mxu0 0.0
      %533 = vmatpush1.xpose.msra.mxu0 0.0
      %534 = vmatprep.subr.mxu0 0.0
      %535 = vmatpush1.xpose.msra.mxu0 0.0
      %536 = vmatprep.subr.mxu0 0.0
      %537 = vmatpush1.xpose.msra.mxu0 0.0
      %538 = vmatprep.subr.mxu0 0.0
      %539 = vmatpush1.xpose.msra.mxu0 0.0
      %540 = vmatprep.subr.mxu0 0.0
      %541 = vmatpush1.xpose.msra.mxu0 0.0
      %542 = vmatprep.subr.mxu0 0.0
      %543 = vmatpush1.xpose.msra.mxu0 0.0
      %544 = vmatprep.subr.mxu0 0.0
      %545 = vmatpush1.xpose.msra.mxu0 0.0
      %546 = vmatprep.subr.mxu0 0.0
      %547 = vmatpush1.xpose.msra.mxu0 0.0
      %548 = vmatprep.subr.mxu0 0.0
      %549 = vmatpush1.xpose.msra.mxu0 0.0
      %550 = vmatprep.subr.mxu0 0.0
      %551 = vmatpush1.xpose.msra.mxu0 0.0
      %552 = vmatprep.subr.mxu0 0.0
      %553 = vmatpush1.xpose.msra.mxu0 0.0
      %554 = vmatprep.subr.mxu0 0.0
      %555 = vmatpush1.xpose.msra.mxu0 0.0
      %556 = vmatprep.subr.mxu0 0.0
      %557 = vmatpush1.xpose.msra.mxu0 0.0
      %558 = vmatprep.subr.mxu0 0.0
      %559 = vmatpush1.xpose.msra.mxu0 0.0
      %560 = vmatprep.subr.mxu0 0.0
      %561 = vmatpush1.xpose.msra.mxu0 0.0
      %562 = vmatprep.mubr.f32.mxu0 0.0
      %563 = vmatmul.mubr.f32.gmra.mrb[0].mxu0 %v490
      %v564 = vpop.f32.mrb[0].mxu0
      %v565 = vadd.f32 %v486, %v564
      %v566 = vpop.f32.mrb[0].mxu0
      %567 = vdwg.mxu0
      %v568 = vld [vmem:[%s6] sm:$0x1]
      %570 = vset.pattern.permute.xlu0 0
      %571 = vperm.xlu0 %570, %v403
      %v572 = vpop.permute.xlu0 %571
      %v575 = vlaneseq
      %v576 = vshrl.u32 %v575, 7
      %v577 = vsub.s32 0, %v576
      %v578 = vrot.slane %v568, %v577
      %v580 = vmul.f32 %v572, %v578
      %v581 = vadd.f32 %v565, %v580
      %582 = vst.msk [vmem:[#allocation5] sm:$0xff] %vm250, %v581
    $region41: #{tpu_custom_call.1} parent=1 // pred_fallthru
      _
    // Predicated region
    $region42: #{tpu_custom_call.1} parent=1 // pred_check
      _
    $region43: #{tpu_custom_call.1} parent=1 // pred_check_branch
      %584 = sbr.rel (0) target = $region45
    $region44: #{tpu_custom_call.1} parent=1 // pred_region
      %s586 = ssub.s32 128, 128
      %587 = vsyncadd [#allocation6], %s586
      %s589 = sshll.u32 [#allocation5], 4
      %s590 = int_to_ptr.vmem [resolvable:$true] %s589
      %592 = dma.vmem_to_hbm [thread:$0]  %s590, 128, %s7, [#allocation6]
    $region45: #{tpu_custom_call.1} parent=1 // pred_fallthru
      _
    // Predicated region
    $region46: #{tpu_custom_call.1} parent=1 // pred_check
      _
    $region47: #{tpu_custom_call.1} parent=1 // pred_check_branch
      %594 = sbr.rel (0) target = $region49
    $region48: #{tpu_custom_call.1} parent=1 // pred_region
      %595 = dma.done [#allocation6], 128
    $region49: #{tpu_custom_call.1} parent=1 // pred_fallthru
      _
    %596 = vsyncpa [#allocation6], 1

</llo_original>
